<compile_context>
chip_gen: v6e
topology: v6e:2x2x1
jax: 0.10.0
libtpu: 0.0.40
codegen_flags: <defaults>
</compile_context>

<pallas_src>
import numpy as np
import jax
import jax.numpy as jnp
from jax import lax
from jax.experimental import pallas as pl
from jax.experimental.pallas import tpu as pltpu


def _round_up(n, m):
    return ((n + m - 1) // m) * m


# ----------------------------- Pallas kernels -----------------------------

def _logreg_attention_kernel(x_ref, wfct_ref, pos_ref, seg_ref, scal_ref,
                             out_ref, m_sc, l_sc, acc_sc):
    # x:    (TILE_B, F_pad)  padded flattened input tile
    # wfct: (F_pad, 1)       fc weight, transposed for MXU matvec
    # pos:  (TILE_B, 1)      positional encoding
    # seg:  (TILE_B, 1)      int32 group (segment) ids; padded rows -> dummy id
    # scal: SMEM (4,)        [fc_bias, w_pos, w_proba, att_bias]
    # out:  (1, G_pad)       per-group pooled probability (lane-dense)
    t = pl.program_id(0)
    nt = pl.num_programs(0)
    tile_b = x_ref.shape[0]
    g_pad = out_ref.shape[1]

    @pl.when(t == 0)
    def _init():
        m_sc[...] = jnp.full_like(m_sc, -1e30)
        l_sc[...] = jnp.zeros_like(l_sc)
        acc_sc[...] = jnp.zeros_like(acc_sc)

    b_fc = scal_ref[0]
    w_pos = scal_ref[1]
    w_prb = scal_ref[2]
    b_att = scal_ref[3]

    # proba = sigmoid(fc(x)) -- fc matvec on the MXU
    logit = jnp.dot(x_ref[...], wfct_ref[...],
                    preferred_element_type=jnp.float32) + b_fc        # (TILE_B, 1)
    proba = jax.nn.sigmoid(logit)

    # attention logit: [pos, proba] @ W_att.T + b_att as two scalar FMAs
    att = pos_ref[...] * w_pos + proba * w_prb + b_att                # (TILE_B, 1)

    # one-hot membership for this tile, built in vregs from segment ids
    lane = lax.broadcasted_iota(jnp.int32, (tile_b, g_pad), 1)
    mask = seg_ref[...] == lane                                       # (TILE_B, G_pad)
    memb = mask.astype(jnp.float32)

    # online (flash-style) per-group softmax accumulation across B tiles
    m_tile = jnp.max(jnp.where(mask, att, -1e30), axis=0, keepdims=True)
    m_new = jnp.maximum(m_sc[...], m_tile)                            # (1, G_pad)
    alpha = jnp.exp(m_sc[...] - m_new)                                # (1, G_pad)
    # per-row group max gather: memb @ m_new.T (MXU)
    row_m = lax.dot_general(memb, m_new, (((1,), (1,)), ((), ())),
                            preferred_element_type=jnp.float32)       # (TILE_B, 1)
    e = jnp.exp(att - row_m)                                          # (TILE_B, 1)
    # segment sums as (1, TILE_B) @ (TILE_B, G_pad) contractions (MXU)
    l_sc[...] = alpha * l_sc[...] + lax.dot_general(
        e, memb, (((0,), (0,)), ((), ())),
        preferred_element_type=jnp.float32)
    acc_sc[...] = alpha * acc_sc[...] + lax.dot_general(
        e * proba, memb, (((0,), (0,)), ((), ())),
        preferred_element_type=jnp.float32)
    m_sc[...] = m_new

    @pl.when(t == nt - 1)
    def _finalize():
        out_ref[...] = acc_sc[...] * pl.reciprocal(l_sc[...], approx=True)


def _logreg_mean_kernel(x_ref, wfct_ref, seg_ref, scal_ref,
                        out_ref, sum_sc, cnt_sc):
    # attention=False path: per-group mean of sigmoid(fc(x))
    t = pl.program_id(0)
    nt = pl.num_programs(0)
    tile_b = x_ref.shape[0]
    g_pad = out_ref.shape[1]

    @pl.when(t == 0)
    def _init():
        sum_sc[...] = jnp.zeros_like(sum_sc)
        cnt_sc[...] = jnp.zeros_like(cnt_sc)

    b_fc = scal_ref[0]
    logit = jnp.dot(x_ref[...], wfct_ref[...],
                    preferred_element_type=jnp.float32) + b_fc        # (TILE_B, 1)
    proba = jax.nn.sigmoid(logit)

    lane = lax.broadcasted_iota(jnp.int32, (tile_b, g_pad), 1)
    memb = (seg_ref[...] == lane).astype(jnp.float32)                 # (TILE_B, G_pad)

    sum_sc[...] += lax.dot_general(proba, memb, (((0,), (0,)), ((), ())),
                                   preferred_element_type=jnp.float32)
    cnt_sc[...] += jnp.sum(memb, axis=0, keepdims=True)

    @pl.when(t == nt - 1)
    def _finalize():
        out_ref[...] = sum_sc[...] * pl.reciprocal(cnt_sc[...], approx=True)


# ------------------------------ JAX wrapper --------------------------------

def logistic_regression_forward(x, slices, params, attention=True):
    """x: (B, C, D) float; slices: python list of positive group sizes (sum == B)."""
    b, c, d = x.shape
    f = c * d
    g = len(slices)
    assert sum(slices) == b, "slices must sum to the batch dimension"
    assert all(n > 0 for n in slices), "empty groups are not supported"
    wfc, bfc, watt, batt = params

    # Lane-dense padded sizes.  TILE_B is capped so double-buffered x tiles fit
    # comfortably in VMEM even on v7x (64 MiB total / 32 MiB scoped default).
    f_pad = _round_up(max(f, 1), 128)
    tile_b = min(512, _round_up(b, 8))
    b_pad = _round_up(b, tile_b)
    g_pad = _round_up(max(g, 1), 128)
    if b_pad > b and g == g_pad:
        g_pad += 128                      # reserve a dummy group lane for padded rows

    # x -> (B_pad, F_pad) zero padded; fc weight -> (F_pad, 1) for MXU matvec.
    x2 = x.reshape(b, f).astype(jnp.float32)
    x2 = jnp.pad(x2, ((0, b_pad - b), (0, f_pad - f)))
    wfc_t = jnp.pad(jnp.asarray(wfc, jnp.float32).reshape(1, f),
                    ((0, 0), (0, f_pad - f))).T                       # (F_pad, 1)

    # Host-side glue for the ragged `slices`: O(B) segment ids + positions.
    seg_np = np.full((b_pad, 1), g, dtype=np.int32)   # padded rows -> dummy group
    seg_np[:b, 0] = np.repeat(np.arange(g, dtype=np.int32), slices)
    pos_np = np.zeros((b_pad, 1), dtype=np.float32)
    pos_np[:b, 0] = np.concatenate(
        [np.arange(n, dtype=np.float32) / n for n in slices])
    seg = jnp.asarray(seg_np)
    pos = jnp.asarray(pos_np)

    nt = b_pad // tile_b
    x_spec = pl.BlockSpec((tile_b, f_pad), lambda t: (t, 0))
    w_spec = pl.BlockSpec((f_pad, 1), lambda t: (0, 0))
    col_spec = pl.BlockSpec((tile_b, 1), lambda t: (t, 0))
    smem_spec = pl.BlockSpec(memory_space=pltpu.MemorySpace.SMEM)
    out_spec = pl.BlockSpec((1, g_pad), lambda t: (0, 0))
    cparams = pltpu.CompilerParams(dimension_semantics=("arbitrary",))

    if attention:
        scal = jnp.concatenate([
            jnp.asarray(bfc, jnp.float32).reshape(-1),
            jnp.asarray(watt, jnp.float32).reshape(-1),
            jnp.asarray(batt, jnp.float32).reshape(-1)])              # (4,)
        out = pl.pallas_call(
            _logreg_attention_kernel,
            out_shape=jax.ShapeDtypeStruct((1, g_pad), jnp.float32),
            grid_spec=pltpu.PrefetchScalarGridSpec(
                num_scalar_prefetch=0,
                grid=(nt,),
                in_specs=[x_spec, w_spec, col_spec, col_spec, smem_spec],
                out_specs=out_spec,
                scratch_shapes=[pltpu.VMEM((1, g_pad), jnp.float32)] * 3),
            compiler_params=cparams,
        )(x2, wfc_t, pos, seg, scal)
    else:
        scal = jnp.asarray(bfc, jnp.float32).reshape(-1)              # (1,)
        out = pl.pallas_call(
            _logreg_mean_kernel,
            out_shape=jax.ShapeDtypeStruct((1, g_pad), jnp.float32),
            grid_spec=pltpu.PrefetchScalarGridSpec(
                num_scalar_prefetch=0,
                grid=(nt,),
                in_specs=[x_spec, w_spec, col_spec, smem_spec],
                out_specs=out_spec,
                scratch_shapes=[pltpu.VMEM((1, g_pad), jnp.float32)] * 2),
            compiler_params=cparams,
        )(x2, wfc_t, seg, scal)

    # torch returns a (G, 1) column of per-group pooled values
    return out[:, :g].reshape(g, 1)


# ---------------------------- numpy reference -------------------------------

def _reference_forward(x, slices, params, attention):
    wfc, bfc, watt, batt = [np.asarray(p, dtype=np.float64) for p in params]
    b = x.shape[0]
    xf = np.asarray(x, dtype=np.float64).reshape(b, -1)
    proba = 1.0 / (1.0 + np.exp(-(xf @ wfc.T + bfc)))                 # (B, 1)
    offs = np.cumsum([0] + list(slices))
    ng = len(slices)
    if not attention:
        return np.stack([proba[offs[i]:offs[i + 1]].mean(axis=0) for i in range(ng)])
    pos = np.concatenate([np.arange(n) / n for n in slices])[:, None]
    phi = np.hstack([pos, proba])
    wts = phi @ watt.T + batt                                         # (B, 1)
    att_list = []
    for i in range(ng):
        s = wts[offs[i]:offs[i + 1]]
        e = np.exp(s - s.max(axis=0, keepdims=True))
        att_list.append(e / e.sum(axis=0, keepdims=True))
    aw = np.vstack(att_list)
    ctx = aw * proba
    return np.vstack([ctx[offs[i]:offs[i + 1]].sum(axis=0) for i in range(ng)])


# --------------------------------- main -------------------------------------

if __name__ == "__main__":
    # Small shapes: B(total rows) = 8, grouped by slices=[3,3,2]; C=4, D=16.
    B, C, D = 8, 4, 16
    slices = [3, 3, 2]
    assert sum(slices) == B
    F = C * D

    key = jax.random.PRNGKey(0)
    kx, kw, kb, kaw, kab = jax.random.split(key, 5)

    x = jax.random.normal(kx, (B, C, D), dtype=jnp.float32)

    # Deterministic parameter init (nn.Linear-style uniform bounds).
    fc_bound = 1.0 / np.sqrt(F)
    wfc = jax.random.uniform(kw, (1, F), jnp.float32, -fc_bound, fc_bound)      # LazyLinear weight
    bfc = jax.random.uniform(kb, (1, 1), jnp.float32, -fc_bound, fc_bound)      # LazyLinear bias
    att_bound = 1.0 / np.sqrt(2.0)
    watt = jax.random.uniform(kaw, (1, 2), jnp.float32, -att_bound, att_bound)  # Linear(2,1) weight
    batt = jax.random.uniform(kab, (1, 1), jnp.float32, -att_bound, att_bound)  # Linear(2,1) bias
    params = (wfc, bfc, watt, batt)

    # attention=True path (AttentionPooling)
    out_attn = logistic_regression_forward(x, slices, params, attention=True)
    out_attn = jax.block_until_ready(out_attn)
    ref_attn = _reference_forward(np.asarray(x), slices, params, attention=True)
    assert out_attn.shape == (len(slices), 1)
    # tolerance relaxed slightly for the approx (EUP) reciprocal in the softmax denom
    assert np.allclose(np.asarray(out_attn), ref_attn, atol=2e-3, rtol=2e-3), \
        "attention path mismatch"

    # attention=False path (per-group mean)
    out_mean = logistic_regression_forward(x, slices, params, attention=False)
    out_mean = jax.block_until_ready(out_mean)
    ref_mean = _reference_forward(np.asarray(x), slices, params, attention=False)
    assert out_mean.shape == (len(slices), 1)
    assert np.allclose(np.asarray(out_mean), ref_mean, atol=2e-3, rtol=2e-3), \
        "mean path mismatch"

    print("KERNEL_OK")
</pallas_src>

<mosaic_0001>
module attributes {stable_mosaic.version = 11 : i64} {
  func.func @_logreg_attention_kernel(%arg0: i32, %arg1: memref<8x128xf32, #tpu.memory_space<vmem>>, %arg2: memref<128x1xf32, #tpu.memory_space<vmem>>, %arg3: memref<8x1xf32, #tpu.memory_space<vmem>>, %arg4: memref<8x1xi32, #tpu.memory_space<vmem>>, %arg5: memref<4xf32, #tpu.memory_space<smem>>, %arg6: memref<1x128xf32, #tpu.memory_space<vmem>>, %arg7: memref<1x128xf32, #tpu.memory_space<vmem>>, %arg8: memref<1x128xf32, #tpu.memory_space<vmem>>, %arg9: memref<1x128xf32, #tpu.memory_space<vmem>>) attributes {dimension_semantics = [#tpu.dimension_semantics<arbitrary>], iteration_bounds = array<i64: 1>, scalar_prefetch = 0 : i64, scratch_operands = 3 : i64, tpu.core_type = #tpu.core_type<tc>, window_params = [{transform_indices = @transform_0, window_bounds = array<i64: 8, 128>}, {pipeline_mode = #tpu.pipeline_mode<synchronous>, transform_indices = @transform_1, window_bounds = array<i64: 128, 1>}, {transform_indices = @transform_2, window_bounds = array<i64: 8, 1>}, {transform_indices = @transform_3, window_bounds = array<i64: 8, 1>}, {transform_indices = @transform_4, window_bounds = array<i64: 4>}, {pipeline_mode = #tpu.pipeline_mode<synchronous>, transform_indices = @transform_5, window_bounds = array<i64: 1, 128>}]} {
    %c0_i32 = arith.constant 0 : i32
    %0 = arith.cmpi eq, %arg0, %c0_i32 : i32
    %1 = arith.extui %0 : i1 to i32
    %c0_i32_0 = arith.constant 0 : i32
    %2 = arith.cmpi ne, %1, %c0_i32_0 : i32
    scf.if %2 {
      %cst_31 = arith.constant -1.000000e+30 : f32
      %60 = vector.broadcast %cst_31 : f32 to vector<1x128xf32>
      %c0_32 = arith.constant 0 : index
      %c0_33 = arith.constant 0 : index
      %61 = vector.load %arg7[%c0_32, %c0_33] : memref<1x128xf32, #tpu.memory_space<vmem>>, vector<1x128xf32>
      tpu.vector_store %arg7[%c0_32, %c0_33], %60 {strides = array<i32>} : memref<1x128xf32, #tpu.memory_space<vmem>>, vector<1x128xf32>,
      %cst_34 = arith.constant 0.000000e+00 : f32
      %62 = vector.broadcast %cst_34 : f32 to vector<1x128xf32>
      %c0_35 = arith.constant 0 : index
      %c0_36 = arith.constant 0 : index
      %63 = vector.load %arg8[%c0_35, %c0_36] : memref<1x128xf32, #tpu.memory_space<vmem>>, vector<1x128xf32>
      tpu.vector_store %arg8[%c0_35, %c0_36], %62 {strides = array<i32>} : memref<1x128xf32, #tpu.memory_space<vmem>>, vector<1x128xf32>,
      %cst_37 = arith.constant 0.000000e+00 : f32
      %64 = vector.broadcast %cst_37 : f32 to vector<1x128xf32>
      %c0_38 = arith.constant 0 : index
      %c0_39 = arith.constant 0 : index
      %65 = vector.load %arg9[%c0_38, %c0_39] : memref<1x128xf32, #tpu.memory_space<vmem>>, vector<1x128xf32>
      tpu.vector_store %arg9[%c0_38, %c0_39], %64 {strides = array<i32>} : memref<1x128xf32, #tpu.memory_space<vmem>>, vector<1x128xf32>,
    } else {
    }
    %c0 = arith.constant 0 : index
    %3 = memref.load %arg5[%c0] : memref<4xf32, #tpu.memory_space<smem>>
    %c1 = arith.constant 1 : index
    %4 = memref.load %arg5[%c1] : memref<4xf32, #tpu.memory_space<smem>>
    %c2 = arith.constant 2 : index
    %5 = memref.load %arg5[%c2] : memref<4xf32, #tpu.memory_space<smem>>
    %c3 = arith.constant 3 : index
    %6 = memref.load %arg5[%c3] : memref<4xf32, #tpu.memory_space<smem>>
    %c0_1 = arith.constant 0 : index
    %c0_2 = arith.constant 0 : index
    %7 = vector.load %arg1[%c0_1, %c0_2] : memref<8x128xf32, #tpu.memory_space<vmem>>, vector<8x128xf32>
    %c0_3 = arith.constant 0 : index
    %c0_4 = arith.constant 0 : index
    %8 = vector.load %arg2[%c0_3, %c0_4] : memref<128x1xf32, #tpu.memory_space<vmem>>, vector<128x1xf32>
    %cst = arith.constant dense<0.000000e+00> : vector<8x1xf32>
    %9 = tpu.matmul %7, %8, %cst {dimension_numbers = #tpu.dot_dimension_numbers<[1], [0], [0], [1], [0, 0, 1, 1], [], []>} : vector<8x128xf32>, vector<128x1xf32>, vector<8x1xf32> -> vector<8x1xf32>
    %10 = vector.broadcast %3 : f32 to vector<8x1xf32>
    %11 = arith.addf %9, %10 : vector<8x1xf32>
    %12 = arith.negf %11 : vector<8x1xf32>
    %13 = math.exp %12 : vector<8x1xf32>
    %cst_5 = arith.constant 1.000000e+00 : f32
    %14 = vector.broadcast %cst_5 : f32 to vector<8x1xf32>
    %15 = arith.addf %14, %13 : vector<8x1xf32>
    %16 = arith.divf %14, %15 : vector<8x1xf32>
    %c0_6 = arith.constant 0 : index
    %c0_7 = arith.constant 0 : index
    %17 = vector.load %arg3[%c0_6, %c0_7] : memref<8x1xf32, #tpu.memory_space<vmem>>, vector<8x1xf32>
    %18 = vector.broadcast %4 : f32 to vector<8x1xf32>
    %19 = arith.mulf %17, %18 : vector<8x1xf32>
    %20 = vector.broadcast %5 : f32 to vector<8x1xf32>
    %21 = arith.mulf %16, %20 : vector<8x1xf32>
    %22 = arith.addf %19, %21 : vector<8x1xf32>
    %23 = vector.broadcast %6 : f32 to vector<8x1xf32>
    %24 = arith.addf %22, %23 : vector<8x1xf32>
    %25 = tpu.iota {dimensions = array<i32: 1>} : vector<8x128xi32>
    %c0_8 = arith.constant 0 : index
    %c0_9 = arith.constant 0 : index
    %26 = vector.load %arg4[%c0_8, %c0_9] : memref<8x1xi32, #tpu.memory_space<vmem>>, vector<8x1xi32>
    %27 = vector.broadcast %26 : vector<8x1xi32> to vector<8x128xi32>
    %28 = arith.cmpi eq, %27, %25 : vector<8x128xi32>
    %29 = arith.extui %28 : vector<8x128xi1> to vector<8x128xi32>
    %30 = arith.sitofp %29 : vector<8x128xi32> to vector<8x128xf32>
    %cst_10 = arith.constant -1.000000e+30 : f32
    %31 = vector.shape_cast %24 : vector<8x1xf32> to vector<8x1xf32>
    %32 = vector.broadcast %31 : vector<8x1xf32> to vector<8x128xf32>
    %33 = vector.broadcast %cst_10 : f32 to vector<8x128xf32>
    %34 = arith.select %28, %32, %33 : vector<8x128xi1>, vector<8x128xf32>
    %cst_11 = arith.constant dense<0xFF800000> : vector<128xf32>
    %35 = vector.multi_reduction <maximumf>, %34, %cst_11 [0] : vector<8x128xf32> to vector<128xf32>
    %36 = vector.shape_cast %35 : vector<128xf32> to vector<1x128xf32>
    %c0_12 = arith.constant 0 : index
    %c0_13 = arith.constant 0 : index
    %37 = vector.load %arg7[%c0_12, %c0_13] : memref<1x128xf32, #tpu.memory_space<vmem>>, vector<1x128xf32>
    %38 = arith.maximumf %37, %36 : vector<1x128xf32>
    %c0_14 = arith.constant 0 : index
    %c0_15 = arith.constant 0 : index
    %39 = vector.load %arg7[%c0_14, %c0_15] : memref<1x128xf32, #tpu.memory_space<vmem>>, vector<1x128xf32>
    %40 = arith.subf %39, %38 : vector<1x128xf32>
    %41 = math.exp %40 : vector<1x128xf32>
    %cst_16 = arith.constant dense<0.000000e+00> : vector<8x1xf32>
    %42 = tpu.matmul %30, %38, %cst_16 {dimension_numbers = #tpu.dot_dimension_numbers<[1], [1], [0], [0], [0, 0, 1, 0], [], []>} : vector<8x128xf32>, vector<1x128xf32>, vector<8x1xf32> -> vector<8x1xf32>
    %43 = arith.subf %24, %42 : vector<8x1xf32>
    %44 = math.exp %43 : vector<8x1xf32>
    %c0_17 = arith.constant 0 : index
    %c0_18 = arith.constant 0 : index
    %45 = vector.load %arg8[%c0_17, %c0_18] : memref<1x128xf32, #tpu.memory_space<vmem>>, vector<1x128xf32>
    %46 = arith.mulf %41, %45 : vector<1x128xf32>
    %cst_19 = arith.constant dense<0.000000e+00> : vector<1x128xf32>
    %47 = tpu.matmul %44, %30, %cst_19 {dimension_numbers = #tpu.dot_dimension_numbers<[0], [0], [1], [1], [0, 1, 1, 1], [], []>} : vector<8x1xf32>, vector<8x128xf32>, vector<1x128xf32> -> vector<1x128xf32>
    %48 = arith.addf %46, %47 : vector<1x128xf32>
    %c0_20 = arith.constant 0 : index
    %c0_21 = arith.constant 0 : index
    %49 = vector.load %arg8[%c0_20, %c0_21] : memref<1x128xf32, #tpu.memory_space<vmem>>, vector<1x128xf32>
    tpu.vector_store %arg8[%c0_20, %c0_21], %48 {strides = array<i32>} : memref<1x128xf32, #tpu.memory_space<vmem>>, vector<1x128xf32>,
    %c0_22 = arith.constant 0 : index
    %c0_23 = arith.constant 0 : index
    %50 = vector.load %arg9[%c0_22, %c0_23] : memref<1x128xf32, #tpu.memory_space<vmem>>, vector<1x128xf32>
    %51 = arith.mulf %41, %50 : vector<1x128xf32>
    %52 = arith.mulf %44, %16 : vector<8x1xf32>
    %cst_24 = arith.constant dense<0.000000e+00> : vector<1x128xf32>
    %53 = tpu.matmul %52, %30, %cst_24 {dimension_numbers = #tpu.dot_dimension_numbers<[0], [0], [1], [1], [0, 1, 1, 1], [], []>} : vector<8x1xf32>, vector<8x128xf32>, vector<1x128xf32> -> vector<1x128xf32>
    %54 = arith.addf %51, %53 : vector<1x128xf32>
    %c0_25 = arith.constant 0 : index
    %c0_26 = arith.constant 0 : index
    %55 = vector.load %arg9[%c0_25, %c0_26] : memref<1x128xf32, #tpu.memory_space<vmem>>, vector<1x128xf32>
    tpu.vector_store %arg9[%c0_25, %c0_26], %54 {strides = array<i32>} : memref<1x128xf32, #tpu.memory_space<vmem>>, vector<1x128xf32>,
    %c0_27 = arith.constant 0 : index
    %c0_28 = arith.constant 0 : index
    %56 = vector.load %arg7[%c0_27, %c0_28] : memref<1x128xf32, #tpu.memory_space<vmem>>, vector<1x128xf32>
    tpu.vector_store %arg7[%c0_27, %c0_28], %38 {strides = array<i32>} : memref<1x128xf32, #tpu.memory_space<vmem>>, vector<1x128xf32>,
    %c0_i32_29 = arith.constant 0 : i32
    %57 = arith.cmpi eq, %arg0, %c0_i32_29 : i32
    %58 = arith.extui %57 : i1 to i32
    %c0_i32_30 = arith.constant 0 : i32
    %59 = arith.cmpi ne, %58, %c0_i32_30 : i32
    scf.if %59 {
      %c0_31 = arith.constant 0 : index
      %c0_32 = arith.constant 0 : index
      %60 = vector.load %arg9[%c0_31, %c0_32] : memref<1x128xf32, #tpu.memory_space<vmem>>, vector<1x128xf32>
      %c0_33 = arith.constant 0 : index
      %c0_34 = arith.constant 0 : index
      %61 = vector.load %arg8[%c0_33, %c0_34] : memref<1x128xf32, #tpu.memory_space<vmem>>, vector<1x128xf32>
      %62 = tpu.reciprocal %61 {approx = true} : vector<1x128xf32> -> vector<1x128xf32>
      %63 = arith.mulf %60, %62 : vector<1x128xf32>
      %c0_35 = arith.constant 0 : index
      %c0_36 = arith.constant 0 : index
      %64 = vector.load %arg6[%c0_35, %c0_36] : memref<1x128xf32, #tpu.memory_space<vmem>>, vector<1x128xf32>
      tpu.vector_store %arg6[%c0_35, %c0_36], %63 {strides = array<i32>} : memref<1x128xf32, #tpu.memory_space<vmem>>, vector<1x128xf32>,
    } else {
    }
    return
  }
  func.func @transform_0(%arg0: i32) -> (i32, i32) {
    %c0_i32 = arith.constant 0 : i32
    %c0_i32_0 = arith.constant 0 : i32
    return %arg0, %c0_i32 : i32, i32
  }
  func.func @transform_1(%arg0: i32) -> (i32, i32) {
    %c0_i32 = arith.constant 0 : i32
    %c0_i32_0 = arith.constant 0 : i32
    %c0_i32_1 = arith.constant 0 : i32
    return %c0_i32, %c0_i32_0 : i32, i32
  }
  func.func @transform_2(%arg0: i32) -> (i32, i32) {
    %c0_i32 = arith.constant 0 : i32
    %c0_i32_0 = arith.constant 0 : i32
    return %arg0, %c0_i32 : i32, i32
  }
  func.func @transform_3(%arg0: i32) -> (i32, i32) {
    %c0_i32 = arith.constant 0 : i32
    %c0_i32_0 = arith.constant 0 : i32
    return %arg0, %c0_i32 : i32, i32
  }
  func.func @transform_4(%arg0: i32) -> i32 {
    %c0_i32 = arith.constant 0 : i32
    %c0_i32_0 = arith.constant 0 : i32
    return %c0_i32 : i32
  }
  func.func @transform_5(%arg0: i32) -> (i32, i32) {
    %c0_i32 = arith.constant 0 : i32
    %c0_i32_0 = arith.constant 0 : i32
    %c0_i32_1 = arith.constant 0 : i32
    return %c0_i32, %c0_i32_0 : i32, i32
  }
}

</mosaic_0001>

<llo_original>
// kernel: tpu_custom_call.1
$region0: #{tpu_custom_call.1}
  #allocation0 [shape = 'u32[]', space=smem, size = 0x4, offset = 0x4, fixed_abs, tag = 'smem constant byte address 0x4 - core index']
  #allocation1 [shape = 'u32[144,128]{1,0:T(1,128)}', space=vmem, size = 0x12000, scoped, tag = 'internal scratch']
  #allocation2 [shape = 'f32[1,128]{1,0:T(1,128)}', space=vmem, size = 0x200, scoped, tag = 'scratch operand']
  #allocation3 [shape = 'f32[1,128]{1,0:T(1,128)}', space=vmem, size = 0x200, scoped, tag = 'scratch operand']
  #allocation4 [shape = 'f32[1,128]{1,0:T(1,128)}', space=vmem, size = 0x200, scoped, tag = 'scratch operand']
  %s0 = inlined_call_operand.vmem [shape: f32[8,128], index: 0, kind: input, shape index: {}]
  %s1 = inlined_call_operand.vmem [shape: f32[128,1], index: 1, kind: input, shape index: {}]
  %s2 = inlined_call_operand.vmem [shape: f32[8,1], index: 2, kind: input, shape index: {}]
  %s3 = inlined_call_operand.vmem [shape: s32[8,1], index: 3, kind: input, shape index: {}]
  %s4 = inlined_call_operand.vmem [shape: f32[4], index: 4, kind: input, shape index: {}]
  %s5 = inlined_call_operand.hbm [shape: f32[1,128], index: 5, kind: output, shape index: {}]
  %s6 = sld [smem:[#allocation0]]
  $region42: #{tpu_custom_call.1} parent=0
    _
  %s8 = ssub.s32 1, %s6
  %s9 = scalar_select 0, %s8, %s6
  $region1: #{tpu_custom_call.1} parent=0
    #allocation5 [shape = 'u8[512]{0}', space=smem, size = 0x200, scoped, tag = 'input window, operand 4, single buffered']
    #allocation6 [shape = 's32[1]{0}', space=sflag, size = 0x4, scoped, tag = 'scoped memory for tpu_custom_call.1']
    #allocation7 [shape = 's32[1]{0}', space=sflag, size = 0x4, scoped, tag = 'scoped memory for tpu_custom_call.1']
    #allocation8 [shape = 'u8[512]{0}', space=vmem, size = 0x400, scoped, tag = 'output window, operand 0, single buffered']
    %10 = vsyncpa [#allocation7], 0
    %11 = vsyncpa [#allocation6], 0
    // Predicated region
    $region2: #{tpu_custom_call.1} parent=1 // pred_check
      _
    $region3: #{tpu_custom_call.1} parent=1 // pred_check_branch
      %13 = sbr.rel (0) target = $region5
    $region4: #{tpu_custom_call.1} parent=1 // pred_region
      _
    $region5: #{tpu_custom_call.1} parent=1 // pred_fallthru
      _
    // Predicated region
    $region6: #{tpu_custom_call.1} parent=1 // pred_check
      _
    $region7: #{tpu_custom_call.1} parent=1 // pred_check_branch
      %15 = sbr.rel (0) target = $region9
    $region8: #{tpu_custom_call.1} parent=1 // pred_region
      _
    $region9: #{tpu_custom_call.1} parent=1 // pred_fallthru
      _
    // Predicated region
    $region10: #{tpu_custom_call.1} parent=1 // pred_check
      _
    $region11: #{tpu_custom_call.1} parent=1 // pred_check_branch
      %17 = sbr.rel (0) target = $region13
    $region12: #{tpu_custom_call.1} parent=1 // pred_region
      _
    $region13: #{tpu_custom_call.1} parent=1 // pred_fallthru
      _
    // Predicated region
    $region14: #{tpu_custom_call.1} parent=1 // pred_check
      _
    $region15: #{tpu_custom_call.1} parent=1 // pred_check_branch
      %19 = sbr.rel (0) target = $region17
    $region16: #{tpu_custom_call.1} parent=1 // pred_region
      _
    $region17: #{tpu_custom_call.1} parent=1 // pred_fallthru
      _
    // Predicated region
    $region18: #{tpu_custom_call.1} parent=1 // pred_check
      _
    $region19: #{tpu_custom_call.1} parent=1 // pred_check_branch
      %21 = sbr.rel (0) target = $region21
    $region20: #{tpu_custom_call.1} parent=1 // pred_region
      %s23 = ssub.s32 16, 16
      %24 = vsyncadd [#allocation7], %s23
      %s26 = sshll.u32 %s4, 4
      %s27 = int_to_ptr.vmem [resolvable:$true] %s26
      %29 = dma.vmem_to_smem %s27, 16, [#allocation5], [#allocation7]
    $region21: #{tpu_custom_call.1} parent=1 // pred_fallthru
      _
    // Predicated region
    $region22: #{tpu_custom_call.1} parent=1 // pred_check
      _
    $region23: #{tpu_custom_call.1} parent=1 // pred_check_branch
      %31 = sbr.rel (0) target = $region25
    $region24: #{tpu_custom_call.1} parent=1 // pred_region
      %32 = dma.done [#allocation7], 16
    $region25: #{tpu_custom_call.1} parent=1 // pred_fallthru
      _
    %33 = sfence
    %p34 = scmp.eq.s32.totalorder 0, 0
    // Predicated region
    $region26: #{tpu_custom_call.1} parent=1 // pred_check
      %p35 = pneg %p34
    $region27: #{tpu_custom_call.1} parent=1 // pred_check_branch
      %37 = sbr.rel (%p35) target = $region29
    $region28: #{tpu_custom_call.1} parent=1 // pred_region
      %38 = vst [vmem:[#allocation2] sm:$0x1] -1e+30
      %39 = vst [vmem:[#allocation3] sm:$0x1] 0.0
      %40 = vst [vmem:[#allocation4] sm:$0x1] 0.0
    $region29: #{tpu_custom_call.1} parent=1 // pred_fallthru
      _
    %s41 = sld [smem:[#allocation5]]
    %s42 = sld [smem:[#allocation5 + $0x1]]
    %s43 = sld [smem:[#allocation5 + $0x2]]
    %s44 = sld [smem:[#allocation5 + $0x3]]
    %v45 = vld [vmem:[%s0] sm:$0xff]
    %v46 = vld [vmem:[%s1] sm:$0xff]
    %v47 = vld [vmem:[%s1 + $0x8] sm:$0xff]
    %v48 = vld [vmem:[%s1 + $0x10] sm:$0xff]
    %v49 = vld [vmem:[%s1 + $0x18] sm:$0xff]
    %v50 = vld [vmem:[%s1 + $0x20] sm:$0xff]
    %v51 = vld [vmem:[%s1 + $0x28] sm:$0xff]
    %v52 = vld [vmem:[%s1 + $0x30] sm:$0xff]
    %v53 = vld [vmem:[%s1 + $0x38] sm:$0xff]
    %v54 = vld [vmem:[%s1 + $0x40] sm:$0xff]
    %v55 = vld [vmem:[%s1 + $0x48] sm:$0xff]
    %v56 = vld [vmem:[%s1 + $0x50] sm:$0xff]
    %v57 = vld [vmem:[%s1 + $0x58] sm:$0xff]
    %v58 = vld [vmem:[%s1 + $0x60] sm:$0xff]
    %v59 = vld [vmem:[%s1 + $0x68] sm:$0xff]
    %v60 = vld [vmem:[%s1 + $0x70] sm:$0xff]
    %v61 = vld [vmem:[%s1 + $0x78] sm:$0xff]
    %v62 = vstv %s41
    %63 = vmatprep.subr.mxu0 0.0
    %64 = vmatpush1.msra.mxu0 %v61
    %65 = vmatprep.subr.mxu0 0.0
    %66 = vmatpush1.msra.mxu0 %v60
    %67 = vmatprep.subr.mxu0 0.0
    %68 = vmatpush1.msra.mxu0 %v59
    %69 = vmatprep.subr.mxu0 0.0
    %70 = vmatpush1.msra.mxu0 %v58
    %71 = vmatprep.subr.mxu0 0.0
    %72 = vmatpush1.msra.mxu0 %v57
    %73 = vmatprep.subr.mxu0 0.0
    %74 = vmatpush1.msra.mxu0 %v56
    %75 = vmatprep.subr.mxu0 0.0
    %76 = vmatpush1.msra.mxu0 %v55
    %77 = vmatprep.subr.mxu0 0.0
    %78 = vmatpush1.msra.mxu0 %v54
    %79 = vmatprep.subr.mxu0 0.0
    %80 = vmatpush1.msra.mxu0 %v53
    %81 = vmatprep.subr.mxu0 0.0
    %82 = vmatpush1.msra.mxu0 %v52
    %83 = vmatprep.subr.mxu0 0.0
    %84 = vmatpush1.msra.mxu0 %v51
    %85 = vmatprep.subr.mxu0 0.0
    %86 = vmatpush1.msra.mxu0 %v50
    %87 = vmatprep.subr.mxu0 0.0
    %88 = vmatpush1.msra.mxu0 %v49
    %89 = vmatprep.subr.mxu0 0.0
    %90 = vmatpush1.msra.mxu0 %v48
    %91 = vmatprep.subr.mxu0 0.0
    %92 = vmatpush1.msra.mxu0 %v47
    %93 = vmatprep.subr.mxu0 0.0
    %94 = vmatpush1.msra.mxu0 %v46
    %95 = vmatprep.subr.mxu0 0.0
    %96 = vmatpush2.msra.mxu0 0.0
    %97 = vmatprep.subr.mxu0 0.0
    %98 = vmatpush2.msra.mxu0 0.0
    %99 = vmatprep.subr.mxu0 0.0
    %100 = vmatpush2.msra.mxu0 0.0
    %101 = vmatprep.subr.mxu0 0.0
    %102 = vmatpush2.msra.mxu0 0.0
    %103 = vmatprep.subr.mxu0 0.0
    %104 = vmatpush2.msra.mxu0 0.0
    %105 = vmatprep.subr.mxu0 0.0
    %106 = vmatpush2.msra.mxu0 0.0
    %107 = vmatprep.subr.mxu0 0.0
    %108 = vmatpush2.msra.mxu0 0.0
    %109 = vmatprep.subr.mxu0 0.0
    %110 = vmatpush2.msra.mxu0 0.0
    %111 = vmatprep.subr.mxu0 0.0
    %112 = vmatpush2.msra.mxu0 0.0
    %113 = vmatprep.subr.mxu0 0.0
    %114 = vmatpush2.msra.mxu0 0.0
    %115 = vmatprep.subr.mxu0 0.0
    %116 = vmatpush2.msra.mxu0 0.0
    %117 = vmatprep.subr.mxu0 0.0
    %118 = vmatpush2.msra.mxu0 0.0
    %119 = vmatprep.subr.mxu0 0.0
    %120 = vmatpush2.msra.mxu0 0.0
    %121 = vmatprep.subr.mxu0 0.0
    %122 = vmatpush2.msra.mxu0 0.0
    %123 = vmatprep.subr.mxu0 0.0
    %124 = vmatpush2.msra.mxu0 0.0
    %125 = vmatprep.subr.mxu0 0.0
    %126 = vmatpush2.msra.mxu0 0.0
    %127 = vmatprep.mubr.f32.mxu0 0.0
    %128 = vmatmul.mubr.f32.gmra.mxu0 %v45
    %v129 = vpop.f32.mrf.mxu0
    %v130 = vadd.f32 %v62, %v129
    %v131 = vpop.f32.mrf.mxu0
    %132 = vdwg.mxu0
    %v133 = vxor.u32 %v130, 2147483648
    %v134 = vmul.f32 %v133, 1.442695
    %v135 = vpow.pop %v134
    %v136 = vadd.f32 %v135, 1.0
    %v137 = vrcp.pop %v136
    %v138 = vmul.f32 1.0, %v137
    %v139 = vld [vmem:[%s2] sm:$0xff]
    %v140 = vstv %s42
    %v141 = vmul.f32 %v139, %v140
    %v142 = vstv %s43
    %v143 = vmul.f32 %v138, %v142
    %v144 = vadd.f32 %v141, %v143
    %v145 = vstv %s44
    %v146 = vadd.f32 %v144, %v145
    %v147 = vlaneseq
    %v148 = vand.u32 %v147, 127
    %v149 = vld [vmem:[%s3] sm:$0xff]
    %150 = vset.pattern.permute.xlu0 0
    %151 = vperm.xlu0 %150, %v149
    %v152 = vpop.permute.xlu0 %151
    %vm153 = vcmp.eq.s32.totalorder %v152, %v148
    %v154 = vsel %vm153, 1, 0
    %v155 = vcvt.s32.f32 %v154
    %157 = vset.pattern.permute.xlu0 0
    %158 = vperm.xlu0 %157, %v146
    %v159 = vpop.permute.xlu0 %158
    %v161 = vsel %vm153, %v159, -1e+30
    %v162 = vrot.slane %v161, 4
    %v163 = vmax.f32 %v161, %v162
    %v164 = vrot.slane %v163, 2
    %v165 = vmax.f32 %v163, %v164
    %v166 = vrot.slane %v165, 1
    %v167 = vmax.f32 %v165, %v166
    %v168 = vld [vmem:[#allocation2] sm:$0x1]
    %v169 = vmax.f32 %v168, %v167
    %v170 = vsub.f32 %v168, %v169
    %v171 = vmul.f32 %v170, 1.442695
    %v172 = vpow.pop %v171
    %v174 = vlaneseq
    %v175 = vshrl.u32 %v174, 7
    %v176 = vsub.s32 0, %v175
    %v177 = vrot.slane %v169, %v176
    %v179 = vmul.f32 %v155, %v177
    %180 = vadd.xlane.f32.xlu0 %v179
    %v181 = vpop.xlane.xlu0 %180
    %v182 = vsub.f32 %v146, %v181
    %v183 = vmul.f32 %v182, 1.442695
    %v184 = vpow.pop %v183
    %v185 = vld [vmem:[#allocation3] sm:$0x1]
    %v186 = vmul.f32 %v172, %v185
    %187 = vxpose.xlu0.b32.start [1/16] %v184, 128
    %188 = vxpose.xlu0.b32.cont [2/16] 0.0, 128
    %189 = vxpose.xlu0.b32.cont [3/16] 0.0, 128
    %190 = vxpose.xlu0.b32.cont [4/16] 0.0, 128
    %191 = vxpose.xlu0.b32.cont [5/16] 0.0, 128
    %192 = vxpose.xlu0.b32.cont [6/16] 0.0, 128
    %193 = vxpose.xlu0.b32.cont [7/16] 0.0, 128
    %194 = vxpose.xlu0.b32.cont [8/16] 0.0, 128
    %195 = vxpose.xlu0.b32.cont [9/16] 0.0, 128
    %196 = vxpose.xlu0.b32.cont [10/16] 0.0, 128
    %197 = vxpose.xlu0.b32.cont [11/16] 0.0, 128
    %198 = vxpose.xlu0.b32.cont [12/16] 0.0, 128
    %199 = vxpose.xlu0.b32.cont [13/16] 0.0, 128
    %200 = vxpose.xlu0.b32.cont [14/16] 0.0, 128
    %201 = vxpose.xlu0.b32.cont [15/16] 0.0, 128
    %202 = vxpose.xlu0.b32.end [16/16] 0.0, 128
    %v203 = vpop.trf.xlu0
    %v204 = vpop.trf.xlu0
    %v205 = vpop.trf.xlu0
    %v206 = vpop.trf.xlu0
    %v207 = vpop.trf.xlu0
    %v208 = vpop.trf.xlu0
    %v209 = vpop.trf.xlu0
    %v210 = vpop.trf.xlu0
    %v211 = vpop.trf.xlu0
    %v212 = vpop.trf.xlu0
    %v213 = vpop.trf.xlu0
    %v214 = vpop.trf.xlu0
    %v215 = vpop.trf.xlu0
    %v216 = vpop.trf.xlu0
    %v217 = vpop.trf.xlu0
    %v218 = vpop.trf.xlu0
    %vm219 = vcmask 64512
    %v221 = vsel %vm219, %v203, 0
    %223 = vmatprep.subr.mxu0 0.0
    %224 = vmatpush1.msra.mxu0 0.0
    %225 = vmatprep.subr.mxu0 0.0
    %226 = vmatpush1.msra.mxu0 0.0
    %227 = vmatprep.subr.mxu0 0.0
    %228 = vmatpush1.msra.mxu0 0.0
    %229 = vmatprep.subr.mxu0 0.0
    %230 = vmatpush1.msra.mxu0 0.0
    %231 = vmatprep.subr.mxu0 0.0
    %232 = vmatpush1.msra.mxu0 0.0
    %233 = vmatprep.subr.mxu0 0.0
    %234 = vmatpush1.msra.mxu0 0.0
    %235 = vmatprep.subr.mxu0 0.0
    %236 = vmatpush1.msra.mxu0 0.0
    %237 = vmatprep.subr.mxu0 0.0
    %238 = vmatpush1.msra.mxu0 0.0
    %239 = vmatprep.subr.mxu0 0.0
    %240 = vmatpush1.msra.mxu0 0.0
    %241 = vmatprep.subr.mxu0 0.0
    %242 = vmatpush1.msra.mxu0 0.0
    %243 = vmatprep.subr.mxu0 0.0
    %244 = vmatpush1.msra.mxu0 0.0
    %245 = vmatprep.subr.mxu0 0.0
    %246 = vmatpush1.msra.mxu0 0.0
    %247 = vmatprep.subr.mxu0 0.0
    %248 = vmatpush1.msra.mxu0 0.0
    %249 = vmatprep.subr.mxu0 0.0
    %250 = vmatpush1.msra.mxu0 0.0
    %251 = vmatprep.subr.mxu0 0.0
    %252 = vmatpush1.msra.mxu0 0.0
    %253 = vmatprep.subr.mxu0 0.0
    %254 = vmatpush1.msra.mxu0 %v155
    %255 = vmatprep.subr.mxu0 0.0
    %256 = vmatpush2.msra.mxu0 0.0
    %257 = vmatprep.subr.mxu0 0.0
    %258 = vmatpush2.msra.mxu0 0.0
    %259 = vmatprep.subr.mxu0 0.0
    %260 = vmatpush2.msra.mxu0 0.0
    %261 = vmatprep.subr.mxu0 0.0
    %262 = vmatpush2.msra.mxu0 0.0
    %263 = vmatprep.subr.mxu0 0.0
    %264 = vmatpush2.msra.mxu0 0.0
    %265 = vmatprep.subr.mxu0 0.0
    %266 = vmatpush2.msra.mxu0 0.0
    %267 = vmatprep.subr.mxu0 0.0
    %268 = vmatpush2.msra.mxu0 0.0
    %269 = vmatprep.subr.mxu0 0.0
    %270 = vmatpush2.msra.mxu0 0.0
    %271 = vmatprep.subr.mxu0 0.0
    %272 = vmatpush2.msra.mxu0 0.0
    %273 = vmatprep.subr.mxu0 0.0
    %274 = vmatpush2.msra.mxu0 0.0
    %275 = vmatprep.subr.mxu0 0.0
    %276 = vmatpush2.msra.mxu0 0.0
    %277 = vmatprep.subr.mxu0 0.0
    %278 = vmatpush2.msra.mxu0 0.0
    %279 = vmatprep.subr.mxu0 0.0
    %280 = vmatpush2.msra.mxu0 0.0
    %281 = vmatprep.subr.mxu0 0.0
    %282 = vmatpush2.msra.mxu0 0.0
    %283 = vmatprep.subr.mxu0 0.0
    %284 = vmatpush2.msra.mxu0 0.0
    %285 = vmatprep.subr.mxu0 0.0
    %286 = vmatpush2.msra.mxu0 0.0
    %287 = vmatprep.mubr.f32.mxu0 0.0
    %288 = vmatmul.mubr.f32.gmra.mxu0 %v221
    %v289 = vpop.f32.mrf.mxu0
    %v290 = vadd.f32 0.0, %v289
    %v291 = vpop.f32.mrf.mxu0
    %292 = vdwg.mxu0
    %v293 = vadd.f32 %v186, %v290
    %294 = vst [vmem:[#allocation3] sm:$0x1] %v293
    %v295 = vld [vmem:[#allocation4] sm:$0x1]
    %v296 = vmul.f32 %v172, %v295
    %v297 = vmul.f32 %v184, %v138
    %298 = vxpose.xlu0.b32.start [1/16] %v297, 128
    %299 = vxpose.xlu0.b32.cont [2/16] 0.0, 128
    %300 = vxpose.xlu0.b32.cont [3/16] 0.0, 128
    %301 = vxpose.xlu0.b32.cont [4/16] 0.0, 128
    %302 = vxpose.xlu0.b32.cont [5/16] 0.0, 128
    %303 = vxpose.xlu0.b32.cont [6/16] 0.0, 128
    %304 = vxpose.xlu0.b32.cont [7/16] 0.0, 128
    %305 = vxpose.xlu0.b32.cont [8/16] 0.0, 128
    %306 = vxpose.xlu0.b32.cont [9/16] 0.0, 128
    %307 = vxpose.xlu0.b32.cont [10/16] 0.0, 128
    %308 = vxpose.xlu0.b32.cont [11/16] 0.0, 128
    %309 = vxpose.xlu0.b32.cont [12/16] 0.0, 128
    %310 = vxpose.xlu0.b32.cont [13/16] 0.0, 128
    %311 = vxpose.xlu0.b32.cont [14/16] 0.0, 128
    %312 = vxpose.xlu0.b32.cont [15/16] 0.0, 128
    %313 = vxpose.xlu0.b32.end [16/16] 0.0, 128
    %v314 = vpop.trf.xlu0
    %v315 = vpop.trf.xlu0
    %v316 = vpop.trf.xlu0
    %v317 = vpop.trf.xlu0
    %v318 = vpop.trf.xlu0
    %v319 = vpop.trf.xlu0
    %v320 = vpop.trf.xlu0
    %v321 = vpop.trf.xlu0
    %v322 = vpop.trf.xlu0
    %v323 = vpop.trf.xlu0
    %v324 = vpop.trf.xlu0
    %v325 = vpop.trf.xlu0
    %v326 = vpop.trf.xlu0
    %v327 = vpop.trf.xlu0
    %v328 = vpop.trf.xlu0
    %v329 = vpop.trf.xlu0
    %v331 = vsel %vm219, %v314, 0
    %333 = vmatprep.subr.mxu0 0.0
    %334 = vmatpush1.msra.mxu0 0.0
    %335 = vmatprep.subr.mxu0 0.0
    %336 = vmatpush1.msra.mxu0 0.0
    %337 = vmatprep.subr.mxu0 0.0
    %338 = vmatpush1.msra.mxu0 0.0
    %339 = vmatprep.subr.mxu0 0.0
    %340 = vmatpush1.msra.mxu0 0.0
    %341 = vmatprep.subr.mxu0 0.0
    %342 = vmatpush1.msra.mxu0 0.0
    %343 = vmatprep.subr.mxu0 0.0
    %344 = vmatpush1.msra.mxu0 0.0
    %345 = vmatprep.subr.mxu0 0.0
    %346 = vmatpush1.msra.mxu0 0.0
    %347 = vmatprep.subr.mxu0 0.0
    %348 = vmatpush1.msra.mxu0 0.0
    %349 = vmatprep.subr.mxu0 0.0
    %350 = vmatpush1.msra.mxu0 0.0
    %351 = vmatprep.subr.mxu0 0.0
    %352 = vmatpush1.msra.mxu0 0.0
    %353 = vmatprep.subr.mxu0 0.0
    %354 = vmatpush1.msra.mxu0 0.0
    %355 = vmatprep.subr.mxu0 0.0
    %356 = vmatpush1.msra.mxu0 0.0
    %357 = vmatprep.subr.mxu0 0.0
    %358 = vmatpush1.msra.mxu0 0.0
    %359 = vmatprep.subr.mxu0 0.0
    %360 = vmatpush1.msra.mxu0 0.0
    %361 = vmatprep.subr.mxu0 0.0
    %362 = vmatpush1.msra.mxu0 0.0
    %363 = vmatprep.subr.mxu0 0.0
    %364 = vmatpush1.msra.mxu0 %v155
    %365 = vmatprep.subr.mxu0 0.0
    %366 = vmatpush2.msra.mxu0 0.0
    %367 = vmatprep.subr.mxu0 0.0
    %368 = vmatpush2.msra.mxu0 0.0
    %369 = vmatprep.subr.mxu0 0.0
    %370 = vmatpush2.msra.mxu0 0.0
    %371 = vmatprep.subr.mxu0 0.0
    %372 = vmatpush2.msra.mxu0 0.0
    %373 = vmatprep.subr.mxu0 0.0
    %374 = vmatpush2.msra.mxu0 0.0
    %375 = vmatprep.subr.mxu0 0.0
    %376 = vmatpush2.msra.mxu0 0.0
    %377 = vmatprep.subr.mxu0 0.0
    %378 = vmatpush2.msra.mxu0 0.0
    %379 = vmatprep.subr.mxu0 0.0
    %380 = vmatpush2.msra.mxu0 0.0
    %381 = vmatprep.subr.mxu0 0.0
    %382 = vmatpush2.msra.mxu0 0.0
    %383 = vmatprep.subr.mxu0 0.0
    %384 = vmatpush2.msra.mxu0 0.0
    %385 = vmatprep.subr.mxu0 0.0
    %386 = vmatpush2.msra.mxu0 0.0
    %387 = vmatprep.subr.mxu0 0.0
    %388 = vmatpush2.msra.mxu0 0.0
    %389 = vmatprep.subr.mxu0 0.0
    %390 = vmatpush2.msra.mxu0 0.0
    %391 = vmatprep.subr.mxu0 0.0
    %392 = vmatpush2.msra.mxu0 0.0
    %393 = vmatprep.subr.mxu0 0.0
    %394 = vmatpush2.msra.mxu0 0.0
    %395 = vmatprep.subr.mxu0 0.0
    %396 = vmatpush2.msra.mxu0 0.0
    %397 = vmatprep.mubr.f32.mxu0 0.0
    %398 = vmatmul.mubr.f32.gmra.mxu0 %v331
    %v399 = vpop.f32.mrf.mxu0
    %v400 = vadd.f32 0.0, %v399
    %v401 = vpop.f32.mrf.mxu0
    %402 = vdwg.mxu0
    %v403 = vadd.f32 %v296, %v400
    %404 = vst [vmem:[#allocation4] sm:$0x1] %v403
    %405 = vst [vmem:[#allocation2] sm:$0x1] %v169
    // Predicated region
    $region30: #{tpu_custom_call.1} parent=1 // pred_check
      %p406 = pneg %p34
    $region31: #{tpu_custom_call.1} parent=1 // pred_check_branch
      %408 = sbr.rel (%p406) target = $region33
    $region32: #{tpu_custom_call.1} parent=1 // pred_region
      %v409 = vld [vmem:[#allocation4] sm:$0x1]
      %v410 = vld [vmem:[#allocation3] sm:$0x1]
      %v411 = vrcp.pop %v410
      %v412 = vmul.f32 %v409, %v411
      %413 = vst [vmem:[#allocation8] sm:$0x1] %v412
    $region33: #{tpu_custom_call.1} parent=1 // pred_fallthru
      _
    // Predicated region
    $region34: #{tpu_custom_call.1} parent=1 // pred_check
      _
    $region35: #{tpu_custom_call.1} parent=1 // pred_check_branch
      %415 = sbr.rel (0) target = $region37
    $region36: #{tpu_custom_call.1} parent=1 // pred_region
      %s417 = ssub.s32 16, 16
      %418 = vsyncadd [#allocation6], %s417
      %s420 = sshll.u32 [#allocation8], 4
      %s421 = int_to_ptr.vmem [resolvable:$true] %s420
      %423 = dma.vmem_to_hbm [thread:$0]  %s421, 16, %s5, [#allocation6]
    $region37: #{tpu_custom_call.1} parent=1 // pred_fallthru
      _
    // Predicated region
    $region38: #{tpu_custom_call.1} parent=1 // pred_check
      _
    $region39: #{tpu_custom_call.1} parent=1 // pred_check_branch
      %425 = sbr.rel (0) target = $region41
    $region40: #{tpu_custom_call.1} parent=1 // pred_region
      %426 = dma.done [#allocation6], 16
    $region41: #{tpu_custom_call.1} parent=1 // pred_fallthru
      _
    %427 = vsyncpa [#allocation6], 1
    %428 = vsyncpa [#allocation7], 1

</llo_original>
